<compile_context>
chip_gen: v6e
topology: v6e:2x2x1
jax: 0.10.0
libtpu: 0.0.40
codegen_flags: <defaults>
</compile_context>

<pallas_src>
import functools

import jax
import jax.numpy as jnp
from jax import lax
from jax.experimental import pallas as pl
from jax.experimental.pallas import tpu as pltpu


# --------------------------------------------------------------------------- #
# helpers
# --------------------------------------------------------------------------- #
def _round_up(x, m):
    return ((x + m - 1) // m) * m


def _cdiv(a, b):
    return -(-a // b)


def _sublane_multiple(dtype):
    """Minimum second-to-last tile dim for this dtype (packed sublane rules)."""
    size = jnp.dtype(dtype).itemsize
    if size >= 4:
        return 8
    if size == 2:
        return 16
    return 32


@functools.lru_cache(maxsize=None)
def _tpu_vmem_and_cores():
    """Best-effort hardware query; safe defaults if unavailable."""
    phys_vmem = 128 << 20   # v5e/v6e default
    n_cores = 1
    try:
        info = pltpu.get_tpu_info()
        v = getattr(info, "vmem_capacity_bytes", None)
        if v:
            phys_vmem = int(v)
        for name in ("num_cores", "num_tensorcores", "tensorcore_count"):
            c = getattr(info, name, None)
            if c:
                n_cores = int(c)
                break
    except Exception:
        pass
    # v7x heuristic: 64 MiB VMEM per TensorCore, 2 TCs per chip.
    if n_cores == 1 and phys_vmem <= (64 << 20):
        n_cores = 2
    return phys_vmem, n_cores


# --------------------------------------------------------------------------- #
# kernels
# --------------------------------------------------------------------------- #
def _linear_head_fused_kernel(x_ref, w_ref, b_ref, o_ref, *, apply_sigmoid,
                              precision):
    # Single K step: whole contraction dim resident. x:(TM,D) w:(D,Lp) b:(1,Lp)
    y = jnp.dot(x_ref[...], w_ref[...],
                preferred_element_type=jnp.float32, precision=precision)
    y = y + b_ref[...].astype(jnp.float32)
    if apply_sigmoid:
        y = jax.nn.sigmoid(y)
    o_ref[...] = y.astype(o_ref.dtype)


def _linear_head_acc_kernel(x_ref, w_ref, b_ref, o_ref, acc_ref, *,
                            apply_sigmoid, precision):
    # Multi K step: f32 VMEM accumulator resident across the (last) K axis.
    k = pl.program_id(1)

    @pl.when(k == 0)
    def _():
        acc_ref[...] = jnp.zeros_like(acc_ref)

    acc_ref[...] += jnp.dot(x_ref[...], w_ref[...],
                            preferred_element_type=jnp.float32,
                            precision=precision)

    @pl.when(k == pl.num_programs(1) - 1)
    def _():
        y = acc_ref[...] + b_ref[...].astype(jnp.float32)
        if apply_sigmoid:
            y = jax.nn.sigmoid(y)
        o_ref[...] = y.astype(o_ref.dtype)


# --------------------------------------------------------------------------- #
# forward implementation
# --------------------------------------------------------------------------- #
def _forward_impl(x, w_t, b_row, num_labels, *, out_dtype, tm_max, tk_max,
                  vmem_budget, phys_vmem, min_batch_tiles):
    B = x.shape[0]
    x2d = x.reshape(B, -1)
    D = x2d.shape[1]
    Dw, L_pad = w_t.shape
    assert Dw == D, f"feature dim mismatch: x has {D}, weight has {Dw}"

    x_it = jnp.dtype(x2d.dtype).itemsize
    w_it = jnp.dtype(w_t.dtype).itemsize
    b_it = jnp.dtype(b_row.dtype).itemsize
    o_it = jnp.dtype(out_dtype).itemsize
    sub = _sublane_multiple(x2d.dtype)

    apply_sigmoid = (num_labels == 2)
    precision = (lax.Precision.HIGHEST if x2d.dtype == jnp.float32 else None)

    # ---- batch tiling: minimize padding; >=2 tiles on multi-TC chips -------
    def pick_tm(cap):
        cap = max(sub, (cap // sub) * sub)
        n_bt = max(min_batch_tiles, _cdiv(B, cap))
        n_bt = min(n_bt, max(1, _cdiv(B, sub)))
        if n_bt == 1:
            # Full-extent block on the batch dim: no (8,128) constraint and
            # no wrapper-side batch padding copy.
            return B, 1, B
        TM = _round_up(_cdiv(B, n_bt), sub)
        return TM, n_bt, n_bt * TM

    # ---- prefer collapsing K to a single step (W^T resident, no acc) -------
    single = None
    min_tm = max(sub, 256)
    cap = tm_max
    while True:
        TM, n_bt, B_pad = pick_tm(cap)
        need = (2 * TM * D * x_it + 2 * D * L_pad * w_it
                + 2 * L_pad * b_it + 2 * TM * L_pad * o_it)
        if need <= vmem_budget:
            single = (TM, n_bt, B_pad, need)
            break
        if TM <= min_tm:
            break
        cap = max(min_tm, cap // 2)

    if single is not None:
        # ---------------- single K step: fused kernel -----------------------
        TM, n_bt, B_pad, need = single
        D_pad = D
        x_p = x2d if B_pad == B else jnp.pad(x2d, ((0, B_pad - B), (0, 0)))
        w_p = w_t

        grid = (n_bt,)
        kernel = functools.partial(_linear_head_fused_kernel,
                                   apply_sigmoid=apply_sigmoid,
                                   precision=precision)
        in_specs = [
            pl.BlockSpec((TM, D), lambda i: (i, 0)),        # x tile
            pl.BlockSpec((D, L_pad), lambda i: (0, 0)),     # W^T (resident)
            pl.BlockSpec((1, L_pad), lambda i: (0, 0)),     # bias (resident)
        ]
        out_specs = pl.BlockSpec((TM, L_pad), lambda i: (i, 0))
        scratch_shapes = []
        dim_sem = ("parallel",)
        w_streams = 1
    else:
        # ---------------- multi K step: accumulator kernel ------------------
        TM, n_bt, B_pad = pick_tm(tm_max)
        fixed = 2 * L_pad * b_it + 2 * TM * L_pad * o_it + TM * L_pad * 4  # acc
        per_tk = 2 * TM * x_it + 2 * L_pad * w_it
        tk_fit = max(128, ((vmem_budget - fixed) // per_tk) // 128 * 128)
        tk_cap = max(128, min((tk_max // 128) * 128, tk_fit))
        D128 = _round_up(D, 128)
        n_kt = _cdiv(D128, tk_cap)
        TK = _round_up(_cdiv(D128, n_kt), 128)
        D_pad = n_kt * TK
        need = fixed + per_tk * TK

        x_p = x2d
        if (B_pad, D_pad) != (B, D):
            # Zero padding contributes nothing to the accumulation -> exact.
            x_p = jnp.pad(x2d, ((0, B_pad - B), (0, D_pad - D)))
        w_p = w_t if D_pad == D else jnp.pad(w_t, ((0, D_pad - D), (0, 0)))

        grid = (n_bt, n_kt)
        kernel = functools.partial(_linear_head_acc_kernel,
                                   apply_sigmoid=apply_sigmoid,
                                   precision=precision)
        in_specs = [
            pl.BlockSpec((TM, TK), lambda i, k: (i, k)),     # x tile
            pl.BlockSpec((TK, L_pad), lambda i, k: (k, 0)),  # W^T tile
            pl.BlockSpec((1, L_pad), lambda i, k: (0, 0)),   # bias (resident)
        ]
        out_specs = pl.BlockSpec((TM, L_pad), lambda i, k: (i, 0))
        scratch_shapes = [pltpu.VMEM((TM, L_pad), jnp.float32)]
        dim_sem = ("parallel", "arbitrary")
        w_streams = n_bt   # W^T is re-streamed once per batch tile

    # ---- VMEM limit from actual buffer arithmetic (+ headroom, < physical) --
    vmem_limit = int(max(32 << 20,
                         min(phys_vmem - (4 << 20), need + (8 << 20))))

    cost = pl.CostEstimate(
        flops=2 * B_pad * D_pad * L_pad,
        transcendentals=(B_pad * L_pad) if apply_sigmoid else 0,
        bytes_accessed=(B_pad * D_pad * x_it
                        + w_streams * D_pad * L_pad * w_it
                        + L_pad * b_it
                        + B_pad * L_pad * o_it),
    )

    out = pl.pallas_call(
        kernel,
        out_shape=jax.ShapeDtypeStruct((B_pad, L_pad), out_dtype),
        grid_spec=pltpu.PrefetchScalarGridSpec(
            num_scalar_prefetch=0,
            grid=grid,
            in_specs=in_specs,
            out_specs=out_specs,
            scratch_shapes=scratch_shapes,
        ),
        compiler_params=pltpu.CompilerParams(
            dimension_semantics=dim_sem,
            vmem_limit_bytes=vmem_limit,
        ),
        cost_estimate=cost,
    )(x_p, w_p, b_row)

    # Slice padded batch / padded labels back to the logical shape.
    return out[:B, :num_labels]


# --------------------------------------------------------------------------- #
# public API
# --------------------------------------------------------------------------- #
def prepare_linear_params(weight, bias):
    """One-time layout prep: W -> [D, L_pad] (MXU-native), bias -> [1, L_pad].

    L is padded to a full 128-lane width so every output store is unmasked.
    """
    L, D = weight.shape
    L_pad = _round_up(L, 128)
    w_t = weight.T                                   # (D, L)
    b_row = bias.reshape(1, L)
    if L_pad != L:
        w_t = jnp.pad(w_t, ((0, 0), (0, L_pad - L)))
        b_row = jnp.pad(b_row, ((0, 0), (0, L_pad - L)))
    return w_t, b_row


def make_linear_classifier(weight, bias, num_labels, *, tm=2048, tk=2048,
                           compute_dtype=None):
    """Factory: preps params once, returns a jitted forward(x) closure.

    compute_dtype: optionally stream x/W as e.g. jnp.bfloat16 (f32 accumulation
    in the MXU). Accuracy-dependent; default keeps native dtypes.
    """
    L, D = weight.shape
    assert L == num_labels and bias.shape == (L,)
    w_t, b_row = prepare_linear_params(weight, bias)
    if compute_dtype is not None:
        w_t = w_t.astype(compute_dtype)

    phys_vmem, n_cores = _tpu_vmem_and_cores()
    # Generation-aware budget: ~48 MiB on v7x (64 MiB/TC), ~64 MiB on v5e/v6e.
    vmem_budget = min(max(phys_vmem - (16 << 20), 16 << 20), 64 << 20)
    min_batch_tiles = 2 if n_cores >= 2 else 1

    def forward(x):
        out_dtype = x.dtype
        if compute_dtype is not None:
            x = x.astype(compute_dtype)
        return _forward_impl(
            x, w_t, b_row, num_labels,
            out_dtype=out_dtype,
            tm_max=tm, tk_max=tk,
            vmem_budget=vmem_budget, phys_vmem=phys_vmem,
            min_batch_tiles=min_batch_tiles,
        )

    return jax.jit(forward)


def linear_classifier_forward(x, weight, bias, num_labels, *, tm=2048, tk=2048):
    """One-off convenience wrapper (prep + forward in one call)."""
    return make_linear_classifier(weight, bias, num_labels, tm=tm, tk=tk)(x)


def init_linear_params(key, dim, num_labels):
    """Deterministic init mimicking torch.nn.Linear default (uniform ±1/sqrt(dim))."""
    kw, kb = jax.random.split(key)
    bound = 1.0 / jnp.sqrt(jnp.float32(dim))
    weight = jax.random.uniform(kw, (num_labels, dim), jnp.float32, -bound, bound)
    bias = jax.random.uniform(kb, (num_labels,), jnp.float32, -bound, bound)
    return weight, bias


# --------------------------------------------------------------------------- #
# demo / self-test
# --------------------------------------------------------------------------- #
if __name__ == "__main__":
    key = jax.random.PRNGKey(0)
    k_x, k_p, k_p2 = jax.random.split(key, 3)

    # "Frozen features" input: batch=8, feature map (4, 4, 2) -> flattened dim = 32
    B, C, H, W = 8, 4, 4, 2
    dim = C * H * W
    num_labels = 16  # != 2 branch: plain linear logits

    x = jax.random.normal(k_x, (B, C, H, W), jnp.float32)
    weight, bias = init_linear_params(k_p, dim, num_labels)

    fwd = make_linear_classifier(weight, bias, num_labels)
    out = jax.block_until_ready(fwd(x))

    ref = x.reshape(B, -1) @ weight.T + bias
    assert out.shape == (B, num_labels)
    assert jnp.allclose(out, ref, atol=1e-5, rtol=1e-5), "mismatch (linear branch)"

    # Also exercise the num_labels == 2 branch (sigmoid fused into the kernel)
    weight2, bias2 = init_linear_params(k_p2, dim, 2)
    fwd2 = make_linear_classifier(weight2, bias2, 2)
    out2 = jax.block_until_ready(fwd2(x))
    ref2 = jax.nn.sigmoid(x.reshape(B, -1) @ weight2.T + bias2)
    assert out2.shape == (B, 2)
    assert jnp.allclose(out2, ref2, atol=1e-5, rtol=1e-5), "mismatch (sigmoid branch)"

    print("KERNEL_OK")
</pallas_src>

<mosaic_0001>
module attributes {stable_mosaic.version = 11 : i64} {
  func.func @_linear_head_fused_kernel(%arg0: i32, %arg1: memref<8x32xf32, #tpu.memory_space<vmem>>, %arg2: memref<32x128xf32, #tpu.memory_space<vmem>>, %arg3: memref<1x128xf32, #tpu.memory_space<vmem>>, %arg4: memref<8x128xf32, #tpu.memory_space<vmem>>) attributes {dimension_semantics = [#tpu.dimension_semantics<parallel>], iteration_bounds = array<i64: 1>, scalar_prefetch = 0 : i64, scratch_operands = 0 : i64, tpu.core_type = #tpu.core_type<tc>, window_params = [{transform_indices = @transform_0, window_bounds = array<i64: 8, 32>}, {pipeline_mode = #tpu.pipeline_mode<synchronous>, transform_indices = @transform_1, window_bounds = array<i64: 32, 128>}, {pipeline_mode = #tpu.pipeline_mode<synchronous>, transform_indices = @transform_2, window_bounds = array<i64: 1, 128>}, {transform_indices = @transform_3, window_bounds = array<i64: 8, 128>}]} {
    %c0 = arith.constant 0 : index
    %c0_0 = arith.constant 0 : index
    %0 = vector.load %arg1[%c0, %c0_0] : memref<8x32xf32, #tpu.memory_space<vmem>>, vector<8x32xf32>
    %c0_1 = arith.constant 0 : index
    %c0_2 = arith.constant 0 : index
    %1 = vector.load %arg2[%c0_1, %c0_2] : memref<32x128xf32, #tpu.memory_space<vmem>>, vector<32x128xf32>
    %cst = arith.constant dense<0.000000e+00> : vector<8x128xf32>
    %2 = tpu.matmul %0, %1, %cst {dimension_numbers = #tpu.dot_dimension_numbers<[1], [0], [0], [1], [0, 0, 1, 1], [], []>, precision = #tpu.contract_precision<fp32>} : vector<8x32xf32>, vector<32x128xf32>, vector<8x128xf32> -> vector<8x128xf32>
    %c0_3 = arith.constant 0 : index
    %c0_4 = arith.constant 0 : index
    %3 = vector.load %arg3[%c0_3, %c0_4] : memref<1x128xf32, #tpu.memory_space<vmem>>, vector<1x128xf32>
    %4 = vector.broadcast %3 : vector<1x128xf32> to vector<8x128xf32>
    %5 = arith.addf %2, %4 : vector<8x128xf32>
    %c0_5 = arith.constant 0 : index
    %c0_6 = arith.constant 0 : index
    %6 = vector.load %arg4[%c0_5, %c0_6] : memref<8x128xf32, #tpu.memory_space<vmem>>, vector<8x128xf32>
    tpu.vector_store %arg4[%c0_5, %c0_6], %5 {strides = array<i32>} : memref<8x128xf32, #tpu.memory_space<vmem>>, vector<8x128xf32>,
    return
  }
  func.func @transform_0(%arg0: i32) -> (i32, i32) {
    %c0_i32 = arith.constant 0 : i32
    %c0_i32_0 = arith.constant 0 : i32
    return %arg0, %c0_i32 : i32, i32
  }
  func.func @transform_1(%arg0: i32) -> (i32, i32) {
    %c0_i32 = arith.constant 0 : i32
    %c0_i32_0 = arith.constant 0 : i32
    %c0_i32_1 = arith.constant 0 : i32
    return %c0_i32, %c0_i32_0 : i32, i32
  }
  func.func @transform_2(%arg0: i32) -> (i32, i32) {
    %c0_i32 = arith.constant 0 : i32
    %c0_i32_0 = arith.constant 0 : i32
    %c0_i32_1 = arith.constant 0 : i32
    return %c0_i32, %c0_i32_0 : i32, i32
  }
  func.func @transform_3(%arg0: i32) -> (i32, i32) {
    %c0_i32 = arith.constant 0 : i32
    %c0_i32_0 = arith.constant 0 : i32
    return %arg0, %c0_i32 : i32, i32
  }
}

</mosaic_0001>

<llo_original>
// kernel: forward.1
$region0: #{forward.1}
  #allocation0 [shape = 'u32[]', space=smem, size = 0x4, offset = 0x4, fixed_abs, tag = 'smem constant byte address 0x4 - core index']
  #allocation1 [shape = 'u32[144,128]{1,0:T(1,128)}', space=vmem, size = 0x12000, scoped, tag = 'internal scratch']
  %s0 = inlined_call_operand.vmem [shape: f32[8,32], index: 0, kind: input, shape index: {}]
  %s1 = inlined_call_operand.vmem [shape: f32[32,128], index: 1, kind: input, shape index: {}]
  %s2 = inlined_call_operand.vmem [shape: f32[1,128], index: 2, kind: input, shape index: {}]
  %s3 = inlined_call_operand.hbm [shape: f32[8,128], index: 3, kind: output, shape index: {}]
  %s4 = sld [smem:[#allocation0]]
  $region22: #{forward.1} parent=0
    _
  %s6 = ssub.s32 1, %s4
  %s7 = scalar_select 0, %s6, %s4
  $region1: #{forward.1} parent=0
    #allocation2 [shape = 'u8[4096]{0}', space=vmem, size = 0x1000, scoped, tag = 'output window, operand 0, single buffered']
    #allocation3 [shape = 's32[1]{0}', space=sflag, size = 0x4, scoped, tag = 'scoped memory for forward.1']
    %8 = vsyncpa [#allocation3], 0
    // Predicated region
    $region2: #{forward.1} parent=1 // pred_check
      _
    $region3: #{forward.1} parent=1 // pred_check_branch
      %10 = sbr.rel (0) target = $region5
    $region4: #{forward.1} parent=1 // pred_region
      _
    $region5: #{forward.1} parent=1 // pred_fallthru
      _
    // Predicated region
    $region6: #{forward.1} parent=1 // pred_check
      _
    $region7: #{forward.1} parent=1 // pred_check_branch
      %12 = sbr.rel (0) target = $region9
    $region8: #{forward.1} parent=1 // pred_region
      _
    $region9: #{forward.1} parent=1 // pred_fallthru
      _
    // Predicated region
    $region10: #{forward.1} parent=1 // pred_check
      _
    $region11: #{forward.1} parent=1 // pred_check_branch
      %14 = sbr.rel (0) target = $region13
    $region12: #{forward.1} parent=1 // pred_region
      _
    $region13: #{forward.1} parent=1 // pred_fallthru
      _
    %v15 = vld [vmem:[%s0] sm:$0xff]
    %v16 = vld [vmem:[%s1] sm:$0xff]
    %v17 = vld [vmem:[%s1 + $0x8] sm:$0xff]
    %v18 = vld [vmem:[%s1 + $0x10] sm:$0xff]
    %v19 = vld [vmem:[%s1 + $0x18] sm:$0xff]
    %v20 = vld [vmem:[%s2] sm:$0x1]
    %v22 = vlaneseq
    %v23 = vshrl.u32 %v22, 7
    %v24 = vsub.s32 0, %v23
    %v25 = vrot.slane %v20, %v24
    %vm27 = vcmask 261120
    %v29 = vsel %vm27, %v15, 0
    %31 = vmatprep.subr.mxu0 0.0
    %32 = vmatpush1.msra.mxu0 0.0
    %33 = vmatprep.subr.mxu0 0.0
    %34 = vmatpush1.msra.mxu0 0.0
    %35 = vmatprep.subr.mxu0 0.0
    %36 = vmatpush1.msra.mxu0 0.0
    %37 = vmatprep.subr.mxu0 0.0
    %38 = vmatpush1.msra.mxu0 0.0
    %39 = vmatprep.subr.mxu0 0.0
    %40 = vmatpush1.msra.mxu0 0.0
    %41 = vmatprep.subr.mxu0 0.0
    %42 = vmatpush1.msra.mxu0 0.0
    %43 = vmatprep.subr.mxu0 0.0
    %44 = vmatpush1.msra.mxu0 0.0
    %45 = vmatprep.subr.mxu0 0.0
    %46 = vmatpush1.msra.mxu0 0.0
    %47 = vmatprep.subr.mxu0 0.0
    %48 = vmatpush1.msra.mxu0 0.0
    %49 = vmatprep.subr.mxu0 0.0
    %50 = vmatpush1.msra.mxu0 0.0
    %51 = vmatprep.subr.mxu0 0.0
    %52 = vmatpush1.msra.mxu0 0.0
    %53 = vmatprep.subr.mxu0 0.0
    %54 = vmatpush1.msra.mxu0 0.0
    %55 = vmatprep.subr.mxu0 0.0
    %v56 = vand.u32 %v19, 4294901760
    %57 = vmatpush1.msra.mxu0 %v56
    %58 = vmatprep.subr.mxu0 0.0
    %v59 = vand.u32 %v18, 4294901760
    %60 = vmatpush1.msra.mxu0 %v59
    %61 = vmatprep.subr.mxu0 0.0
    %v62 = vand.u32 %v17, 4294901760
    %63 = vmatpush1.msra.mxu0 %v62
    %64 = vmatprep.subr.mxu0 0.0
    %v65 = vand.u32 %v16, 4294901760
    %66 = vmatpush1.msra.mxu0 %v65
    %67 = vmatprep.subr.mxu0 0.0
    %68 = vmatpush2.msra.mxu0 0.0
    %69 = vmatprep.subr.mxu0 0.0
    %70 = vmatpush2.msra.mxu0 0.0
    %71 = vmatprep.subr.mxu0 0.0
    %72 = vmatpush2.msra.mxu0 0.0
    %73 = vmatprep.subr.mxu0 0.0
    %74 = vmatpush2.msra.mxu0 0.0
    %75 = vmatprep.subr.mxu0 0.0
    %76 = vmatpush2.msra.mxu0 0.0
    %77 = vmatprep.subr.mxu0 0.0
    %78 = vmatpush2.msra.mxu0 0.0
    %79 = vmatprep.subr.mxu0 0.0
    %80 = vmatpush2.msra.mxu0 0.0
    %81 = vmatprep.subr.mxu0 0.0
    %82 = vmatpush2.msra.mxu0 0.0
    %83 = vmatprep.subr.mxu0 0.0
    %84 = vmatpush2.msra.mxu0 0.0
    %85 = vmatprep.subr.mxu0 0.0
    %86 = vmatpush2.msra.mxu0 0.0
    %87 = vmatprep.subr.mxu0 0.0
    %88 = vmatpush2.msra.mxu0 0.0
    %89 = vmatprep.subr.mxu0 0.0
    %90 = vmatpush2.msra.mxu0 0.0
    %91 = vmatprep.subr.mxu0 0.0
    %92 = vmatpush2.msra.mxu0 0.0
    %93 = vmatprep.subr.mxu0 0.0
    %94 = vmatpush2.msra.mxu0 0.0
    %95 = vmatprep.subr.mxu0 0.0
    %96 = vmatpush2.msra.mxu0 0.0
    %97 = vmatprep.subr.mxu0 0.0
    %98 = vmatpush2.msra.mxu0 0.0
    %99 = vmatprep.mubr.f32.mxu0 0.0
    %v100 = vand.u32 %v29, 4294901760
    %v101 = vsub.f32 %v29, %v100
    %v102 = vand.u32 %v101, 4294901760
    %v103 = vsub.f32 %v101, %v102
    %v104 = vand.u32 %v103, 4294901760
    %105 = vmatmul.mubr.f32.gmra.mxu0 %v104
    %v106 = vpop.f32.mrf.mxu0
    %v107 = vadd.f32 %v25, %v106
    %v108 = vpop.f32.mrf.mxu0
    %109 = vdwg.mxu0
    %110 = vmatprep.subr.mxu0 0.0
    %111 = vmatpush1.msra.mxu0 0.0
    %112 = vmatprep.subr.mxu0 0.0
    %113 = vmatpush1.msra.mxu0 0.0
    %114 = vmatprep.subr.mxu0 0.0
    %115 = vmatpush1.msra.mxu0 0.0
    %116 = vmatprep.subr.mxu0 0.0
    %117 = vmatpush1.msra.mxu0 0.0
    %118 = vmatprep.subr.mxu0 0.0
    %119 = vmatpush1.msra.mxu0 0.0
    %120 = vmatprep.subr.mxu0 0.0
    %121 = vmatpush1.msra.mxu0 0.0
    %122 = vmatprep.subr.mxu0 0.0
    %123 = vmatpush1.msra.mxu0 0.0
    %124 = vmatprep.subr.mxu0 0.0
    %125 = vmatpush1.msra.mxu0 0.0
    %126 = vmatprep.subr.mxu0 0.0
    %127 = vmatpush1.msra.mxu0 0.0
    %128 = vmatprep.subr.mxu0 0.0
    %129 = vmatpush1.msra.mxu0 0.0
    %130 = vmatprep.subr.mxu0 0.0
    %131 = vmatpush1.msra.mxu0 0.0
    %132 = vmatprep.subr.mxu0 0.0
    %133 = vmatpush1.msra.mxu0 0.0
    %134 = vmatprep.subr.mxu0 0.0
    %v135 = vand.u32 %v19, 4294901760
    %v136 = vsub.f32 %v19, %v135
    %v137 = vand.u32 %v136, 4294901760
    %v138 = vsub.f32 %v136, %v137
    %v139 = vand.u32 %v138, 4294901760
    %140 = vmatpush1.msra.mxu0 %v139
    %141 = vmatprep.subr.mxu0 0.0
    %v142 = vand.u32 %v18, 4294901760
    %v143 = vsub.f32 %v18, %v142
    %v144 = vand.u32 %v143, 4294901760
    %v145 = vsub.f32 %v143, %v144
    %v146 = vand.u32 %v145, 4294901760
    %147 = vmatpush1.msra.mxu0 %v146
    %148 = vmatprep.subr.mxu0 0.0
    %v149 = vand.u32 %v17, 4294901760
    %v150 = vsub.f32 %v17, %v149
    %v151 = vand.u32 %v150, 4294901760
    %v152 = vsub.f32 %v150, %v151
    %v153 = vand.u32 %v152, 4294901760
    %154 = vmatpush1.msra.mxu0 %v153
    %155 = vmatprep.subr.mxu0 0.0
    %v156 = vand.u32 %v16, 4294901760
    %v157 = vsub.f32 %v16, %v156
    %v158 = vand.u32 %v157, 4294901760
    %v159 = vsub.f32 %v157, %v158
    %v160 = vand.u32 %v159, 4294901760
    %161 = vmatpush1.msra.mxu0 %v160
    %162 = vmatprep.subr.mxu0 0.0
    %163 = vmatpush2.msra.mxu0 0.0
    %164 = vmatprep.subr.mxu0 0.0
    %165 = vmatpush2.msra.mxu0 0.0
    %166 = vmatprep.subr.mxu0 0.0
    %167 = vmatpush2.msra.mxu0 0.0
    %168 = vmatprep.subr.mxu0 0.0
    %169 = vmatpush2.msra.mxu0 0.0
    %170 = vmatprep.subr.mxu0 0.0
    %171 = vmatpush2.msra.mxu0 0.0
    %172 = vmatprep.subr.mxu0 0.0
    %173 = vmatpush2.msra.mxu0 0.0
    %174 = vmatprep.subr.mxu0 0.0
    %175 = vmatpush2.msra.mxu0 0.0
    %176 = vmatprep.subr.mxu0 0.0
    %177 = vmatpush2.msra.mxu0 0.0
    %178 = vmatprep.subr.mxu0 0.0
    %179 = vmatpush2.msra.mxu0 0.0
    %180 = vmatprep.subr.mxu0 0.0
    %181 = vmatpush2.msra.mxu0 0.0
    %182 = vmatprep.subr.mxu0 0.0
    %183 = vmatpush2.msra.mxu0 0.0
    %184 = vmatprep.subr.mxu0 0.0
    %185 = vmatpush2.msra.mxu0 0.0
    %186 = vmatprep.subr.mxu0 0.0
    %187 = vmatpush2.msra.mxu0 0.0
    %188 = vmatprep.subr.mxu0 0.0
    %189 = vmatpush2.msra.mxu0 0.0
    %190 = vmatprep.subr.mxu0 0.0
    %191 = vmatpush2.msra.mxu0 0.0
    %192 = vmatprep.subr.mxu0 0.0
    %193 = vmatpush2.msra.mxu0 0.0
    %194 = vmatprep.mubr.f32.mxu0 0.0
    %v195 = vand.u32 %v29, 4294901760
    %196 = vmatmul.mubr.f32.gmra.mxu0 %v195
    %v197 = vpop.f32.mrf.mxu0
    %v198 = vadd.f32 %v107, %v197
    %v199 = vpop.f32.mrf.mxu0
    %200 = vdwg.mxu0
    %201 = vmatprep.subr.mxu0 0.0
    %202 = vmatpush1.msra.mxu0 0.0
    %203 = vmatprep.subr.mxu0 0.0
    %204 = vmatpush1.msra.mxu0 0.0
    %205 = vmatprep.subr.mxu0 0.0
    %206 = vmatpush1.msra.mxu0 0.0
    %207 = vmatprep.subr.mxu0 0.0
    %208 = vmatpush1.msra.mxu0 0.0
    %209 = vmatprep.subr.mxu0 0.0
    %210 = vmatpush1.msra.mxu0 0.0
    %211 = vmatprep.subr.mxu0 0.0
    %212 = vmatpush1.msra.mxu0 0.0
    %213 = vmatprep.subr.mxu0 0.0
    %214 = vmatpush1.msra.mxu0 0.0
    %215 = vmatprep.subr.mxu0 0.0
    %216 = vmatpush1.msra.mxu0 0.0
    %217 = vmatprep.subr.mxu0 0.0
    %218 = vmatpush1.msra.mxu0 0.0
    %219 = vmatprep.subr.mxu0 0.0
    %220 = vmatpush1.msra.mxu0 0.0
    %221 = vmatprep.subr.mxu0 0.0
    %222 = vmatpush1.msra.mxu0 0.0
    %223 = vmatprep.subr.mxu0 0.0
    %224 = vmatpush1.msra.mxu0 0.0
    %225 = vmatprep.subr.mxu0 0.0
    %v226 = vand.u32 %v19, 4294901760
    %v227 = vsub.f32 %v19, %v226
    %228 = vmatpush1.msra.mxu0 %v227
    %229 = vmatprep.subr.mxu0 0.0
    %v230 = vand.u32 %v18, 4294901760
    %v231 = vsub.f32 %v18, %v230
    %232 = vmatpush1.msra.mxu0 %v231
    %233 = vmatprep.subr.mxu0 0.0
    %v234 = vand.u32 %v17, 4294901760
    %v235 = vsub.f32 %v17, %v234
    %236 = vmatpush1.msra.mxu0 %v235
    %237 = vmatprep.subr.mxu0 0.0
    %v238 = vand.u32 %v16, 4294901760
    %v239 = vsub.f32 %v16, %v238
    %240 = vmatpush1.msra.mxu0 %v239
    %241 = vmatprep.subr.mxu0 0.0
    %242 = vmatpush2.msra.mxu0 0.0
    %243 = vmatprep.subr.mxu0 0.0
    %244 = vmatpush2.msra.mxu0 0.0
    %245 = vmatprep.subr.mxu0 0.0
    %246 = vmatpush2.msra.mxu0 0.0
    %247 = vmatprep.subr.mxu0 0.0
    %248 = vmatpush2.msra.mxu0 0.0
    %249 = vmatprep.subr.mxu0 0.0
    %250 = vmatpush2.msra.mxu0 0.0
    %251 = vmatprep.subr.mxu0 0.0
    %252 = vmatpush2.msra.mxu0 0.0
    %253 = vmatprep.subr.mxu0 0.0
    %254 = vmatpush2.msra.mxu0 0.0
    %255 = vmatprep.subr.mxu0 0.0
    %256 = vmatpush2.msra.mxu0 0.0
    %257 = vmatprep.subr.mxu0 0.0
    %258 = vmatpush2.msra.mxu0 0.0
    %259 = vmatprep.subr.mxu0 0.0
    %260 = vmatpush2.msra.mxu0 0.0
    %261 = vmatprep.subr.mxu0 0.0
    %262 = vmatpush2.msra.mxu0 0.0
    %263 = vmatprep.subr.mxu0 0.0
    %264 = vmatpush2.msra.mxu0 0.0
    %265 = vmatprep.subr.mxu0 0.0
    %266 = vmatpush2.msra.mxu0 0.0
    %267 = vmatprep.subr.mxu0 0.0
    %268 = vmatpush2.msra.mxu0 0.0
    %269 = vmatprep.subr.mxu0 0.0
    %270 = vmatpush2.msra.mxu0 0.0
    %271 = vmatprep.subr.mxu0 0.0
    %272 = vmatpush2.msra.mxu0 0.0
    %273 = vmatprep.mubr.f32.mxu0 0.0
    %v274 = vand.u32 %v29, 4294901760
    %v275 = vsub.f32 %v29, %v274
    %276 = vmatmul.mubr.f32.gmra.mxu0 %v275
    %v277 = vpop.f32.mrf.mxu0
    %v278 = vadd.f32 %v198, %v277
    %v279 = vpop.f32.mrf.mxu0
    %280 = vdwg.mxu0
    %281 = vmatprep.subr.mxu0 0.0
    %282 = vmatpush1.msra.mxu0 0.0
    %283 = vmatprep.subr.mxu0 0.0
    %284 = vmatpush1.msra.mxu0 0.0
    %285 = vmatprep.subr.mxu0 0.0
    %286 = vmatpush1.msra.mxu0 0.0
    %287 = vmatprep.subr.mxu0 0.0
    %288 = vmatpush1.msra.mxu0 0.0
    %289 = vmatprep.subr.mxu0 0.0
    %290 = vmatpush1.msra.mxu0 0.0
    %291 = vmatprep.subr.mxu0 0.0
    %292 = vmatpush1.msra.mxu0 0.0
    %293 = vmatprep.subr.mxu0 0.0
    %294 = vmatpush1.msra.mxu0 0.0
    %295 = vmatprep.subr.mxu0 0.0
    %296 = vmatpush1.msra.mxu0 0.0
    %297 = vmatprep.subr.mxu0 0.0
    %298 = vmatpush1.msra.mxu0 0.0
    %299 = vmatprep.subr.mxu0 0.0
    %300 = vmatpush1.msra.mxu0 0.0
    %301 = vmatprep.subr.mxu0 0.0
    %302 = vmatpush1.msra.mxu0 0.0
    %303 = vmatprep.subr.mxu0 0.0
    %304 = vmatpush1.msra.mxu0 0.0
    %305 = vmatprep.subr.mxu0 0.0
    %v306 = vand.u32 %v19, 4294901760
    %307 = vmatpush1.msra.mxu0 %v306
    %308 = vmatprep.subr.mxu0 0.0
    %v309 = vand.u32 %v18, 4294901760
    %310 = vmatpush1.msra.mxu0 %v309
    %311 = vmatprep.subr.mxu0 0.0
    %v312 = vand.u32 %v17, 4294901760
    %313 = vmatpush1.msra.mxu0 %v312
    %314 = vmatprep.subr.mxu0 0.0
    %v315 = vand.u32 %v16, 4294901760
    %316 = vmatpush1.msra.mxu0 %v315
    %317 = vmatprep.subr.mxu0 0.0
    %318 = vmatpush2.msra.mxu0 0.0
    %319 = vmatprep.subr.mxu0 0.0
    %320 = vmatpush2.msra.mxu0 0.0
    %321 = vmatprep.subr.mxu0 0.0
    %322 = vmatpush2.msra.mxu0 0.0
    %323 = vmatprep.subr.mxu0 0.0
    %324 = vmatpush2.msra.mxu0 0.0
    %325 = vmatprep.subr.mxu0 0.0
    %326 = vmatpush2.msra.mxu0 0.0
    %327 = vmatprep.subr.mxu0 0.0
    %328 = vmatpush2.msra.mxu0 0.0
    %329 = vmatprep.subr.mxu0 0.0
    %330 = vmatpush2.msra.mxu0 0.0
    %331 = vmatprep.subr.mxu0 0.0
    %332 = vmatpush2.msra.mxu0 0.0
    %333 = vmatprep.subr.mxu0 0.0
    %334 = vmatpush2.msra.mxu0 0.0
    %335 = vmatprep.subr.mxu0 0.0
    %336 = vmatpush2.msra.mxu0 0.0
    %337 = vmatprep.subr.mxu0 0.0
    %338 = vmatpush2.msra.mxu0 0.0
    %339 = vmatprep.subr.mxu0 0.0
    %340 = vmatpush2.msra.mxu0 0.0
    %341 = vmatprep.subr.mxu0 0.0
    %342 = vmatpush2.msra.mxu0 0.0
    %343 = vmatprep.subr.mxu0 0.0
    %344 = vmatpush2.msra.mxu0 0.0
    %345 = vmatprep.subr.mxu0 0.0
    %346 = vmatpush2.msra.mxu0 0.0
    %347 = vmatprep.subr.mxu0 0.0
    %348 = vmatpush2.msra.mxu0 0.0
    %349 = vmatprep.mubr.f32.mxu0 0.0
    %v350 = vand.u32 %v29, 4294901760
    %v351 = vsub.f32 %v29, %v350
    %v352 = vand.u32 %v351, 4294901760
    %353 = vmatmul.mubr.f32.gmra.mxu0 %v352
    %v354 = vpop.f32.mrf.mxu0
    %v355 = vadd.f32 %v278, %v354
    %v356 = vpop.f32.mrf.mxu0
    %357 = vdwg.mxu0
    %358 = vmatprep.subr.mxu0 0.0
    %359 = vmatpush1.msra.mxu0 0.0
    %360 = vmatprep.subr.mxu0 0.0
    %361 = vmatpush1.msra.mxu0 0.0
    %362 = vmatprep.subr.mxu0 0.0
    %363 = vmatpush1.msra.mxu0 0.0
    %364 = vmatprep.subr.mxu0 0.0
    %365 = vmatpush1.msra.mxu0 0.0
    %366 = vmatprep.subr.mxu0 0.0
    %367 = vmatpush1.msra.mxu0 0.0
    %368 = vmatprep.subr.mxu0 0.0
    %369 = vmatpush1.msra.mxu0 0.0
    %370 = vmatprep.subr.mxu0 0.0
    %371 = vmatpush1.msra.mxu0 0.0
    %372 = vmatprep.subr.mxu0 0.0
    %373 = vmatpush1.msra.mxu0 0.0
    %374 = vmatprep.subr.mxu0 0.0
    %375 = vmatpush1.msra.mxu0 0.0
    %376 = vmatprep.subr.mxu0 0.0
    %377 = vmatpush1.msra.mxu0 0.0
    %378 = vmatprep.subr.mxu0 0.0
    %379 = vmatpush1.msra.mxu0 0.0
    %380 = vmatprep.subr.mxu0 0.0
    %381 = vmatpush1.msra.mxu0 0.0
    %382 = vmatprep.subr.mxu0 0.0
    %v383 = vand.u32 %v19, 4294901760
    %v384 = vsub.f32 %v19, %v383
    %v385 = vand.u32 %v384, 4294901760
    %386 = vmatpush1.msra.mxu0 %v385
    %387 = vmatprep.subr.mxu0 0.0
    %v388 = vand.u32 %v18, 4294901760
    %v389 = vsub.f32 %v18, %v388
    %v390 = vand.u32 %v389, 4294901760
    %391 = vmatpush1.msra.mxu0 %v390
    %392 = vmatprep.subr.mxu0 0.0
    %v393 = vand.u32 %v17, 4294901760
    %v394 = vsub.f32 %v17, %v393
    %v395 = vand.u32 %v394, 4294901760
    %396 = vmatpush1.msra.mxu0 %v395
    %397 = vmatprep.subr.mxu0 0.0
    %v398 = vand.u32 %v16, 4294901760
    %v399 = vsub.f32 %v16, %v398
    %v400 = vand.u32 %v399, 4294901760
    %401 = vmatpush1.msra.mxu0 %v400
    %402 = vmatprep.subr.mxu0 0.0
    %403 = vmatpush2.msra.mxu0 0.0
    %404 = vmatprep.subr.mxu0 0.0
    %405 = vmatpush2.msra.mxu0 0.0
    %406 = vmatprep.subr.mxu0 0.0
    %407 = vmatpush2.msra.mxu0 0.0
    %408 = vmatprep.subr.mxu0 0.0
    %409 = vmatpush2.msra.mxu0 0.0
    %410 = vmatprep.subr.mxu0 0.0
    %411 = vmatpush2.msra.mxu0 0.0
    %412 = vmatprep.subr.mxu0 0.0
    %413 = vmatpush2.msra.mxu0 0.0
    %414 = vmatprep.subr.mxu0 0.0
    %415 = vmatpush2.msra.mxu0 0.0
    %416 = vmatprep.subr.mxu0 0.0
    %417 = vmatpush2.msra.mxu0 0.0
    %418 = vmatprep.subr.mxu0 0.0
    %419 = vmatpush2.msra.mxu0 0.0
    %420 = vmatprep.subr.mxu0 0.0
    %421 = vmatpush2.msra.mxu0 0.0
    %422 = vmatprep.subr.mxu0 0.0
    %423 = vmatpush2.msra.mxu0 0.0
    %424 = vmatprep.subr.mxu0 0.0
    %425 = vmatpush2.msra.mxu0 0.0
    %426 = vmatprep.subr.mxu0 0.0
    %427 = vmatpush2.msra.mxu0 0.0
    %428 = vmatprep.subr.mxu0 0.0
    %429 = vmatpush2.msra.mxu0 0.0
    %430 = vmatprep.subr.mxu0 0.0
    %431 = vmatpush2.msra.mxu0 0.0
    %432 = vmatprep.subr.mxu0 0.0
    %433 = vmatpush2.msra.mxu0 0.0
    %434 = vmatprep.mubr.f32.mxu0 0.0
    %v435 = vand.u32 %v29, 4294901760
    %436 = vmatmul.mubr.f32.gmra.mxu0 %v435
    %v437 = vpop.f32.mrf.mxu0
    %v438 = vadd.f32 %v355, %v437
    %v439 = vpop.f32.mrf.mxu0
    %440 = vdwg.mxu0
    %441 = vmatprep.subr.mxu0 0.0
    %442 = vmatpush1.msra.mxu0 0.0
    %443 = vmatprep.subr.mxu0 0.0
    %444 = vmatpush1.msra.mxu0 0.0
    %445 = vmatprep.subr.mxu0 0.0
    %446 = vmatpush1.msra.mxu0 0.0
    %447 = vmatprep.subr.mxu0 0.0
    %448 = vmatpush1.msra.mxu0 0.0
    %449 = vmatprep.subr.mxu0 0.0
    %450 = vmatpush1.msra.mxu0 0.0
    %451 = vmatprep.subr.mxu0 0.0
    %452 = vmatpush1.msra.mxu0 0.0
    %453 = vmatprep.subr.mxu0 0.0
    %454 = vmatpush1.msra.mxu0 0.0
    %455 = vmatprep.subr.mxu0 0.0
    %456 = vmatpush1.msra.mxu0 0.0
    %457 = vmatprep.subr.mxu0 0.0
    %458 = vmatpush1.msra.mxu0 0.0
    %459 = vmatprep.subr.mxu0 0.0
    %460 = vmatpush1.msra.mxu0 0.0
    %461 = vmatprep.subr.mxu0 0.0
    %462 = vmatpush1.msra.mxu0 0.0
    %463 = vmatprep.subr.mxu0 0.0
    %464 = vmatpush1.msra.mxu0 0.0
    %465 = vmatprep.subr.mxu0 0.0
    %v466 = vand.u32 %v19, 4294901760
    %467 = vmatpush1.msra.mxu0 %v466
    %468 = vmatprep.subr.mxu0 0.0
    %v469 = vand.u32 %v18, 4294901760
    %470 = vmatpush1.msra.mxu0 %v469
    %471 = vmatprep.subr.mxu0 0.0
    %v472 = vand.u32 %v17, 4294901760
    %473 = vmatpush1.msra.mxu0 %v472
    %474 = vmatprep.subr.mxu0 0.0
    %v475 = vand.u32 %v16, 4294901760
    %476 = vmatpush1.msra.mxu0 %v475
    %477 = vmatprep.subr.mxu0 0.0
    %478 = vmatpush2.msra.mxu0 0.0
    %479 = vmatprep.subr.mxu0 0.0
    %480 = vmatpush2.msra.mxu0 0.0
    %481 = vmatprep.subr.mxu0 0.0
    %482 = vmatpush2.msra.mxu0 0.0
    %483 = vmatprep.subr.mxu0 0.0
    %484 = vmatpush2.msra.mxu0 0.0
    %485 = vmatprep.subr.mxu0 0.0
    %486 = vmatpush2.msra.mxu0 0.0
    %487 = vmatprep.subr.mxu0 0.0
    %488 = vmatpush2.msra.mxu0 0.0
    %489 = vmatprep.subr.mxu0 0.0
    %490 = vmatpush2.msra.mxu0 0.0
    %491 = vmatprep.subr.mxu0 0.0
    %492 = vmatpush2.msra.mxu0 0.0
    %493 = vmatprep.subr.mxu0 0.0
    %494 = vmatpush2.msra.mxu0 0.0
    %495 = vmatprep.subr.mxu0 0.0
    %496 = vmatpush2.msra.mxu0 0.0
    %497 = vmatprep.subr.mxu0 0.0
    %498 = vmatpush2.msra.mxu0 0.0
    %499 = vmatprep.subr.mxu0 0.0
    %500 = vmatpush2.msra.mxu0 0.0
    %501 = vmatprep.subr.mxu0 0.0
    %502 = vmatpush2.msra.mxu0 0.0
    %503 = vmatprep.subr.mxu0 0.0
    %504 = vmatpush2.msra.mxu0 0.0
    %505 = vmatprep.subr.mxu0 0.0
    %506 = vmatpush2.msra.mxu0 0.0
    %507 = vmatprep.subr.mxu0 0.0
    %508 = vmatpush2.msra.mxu0 0.0
    %509 = vmatprep.mubr.f32.mxu0 0.0
    %v510 = vand.u32 %v29, 4294901760
    %511 = vmatmul.mubr.f32.gmra.mxu0 %v510
    %v512 = vpop.f32.mrf.mxu0
    %v513 = vadd.f32 %v438, %v512
    %v514 = vpop.f32.mrf.mxu0
    %515 = vdwg.mxu0
    %516 = vst [vmem:[#allocation2] sm:$0xff] %v513
    // Predicated region
    $region14: #{forward.1} parent=1 // pred_check
      _
    $region15: #{forward.1} parent=1 // pred_check_branch
      %518 = sbr.rel (0) target = $region17
    $region16: #{forward.1} parent=1 // pred_region
      %s520 = ssub.s32 128, 128
      %521 = vsyncadd [#allocation3], %s520
      %s523 = sshll.u32 [#allocation2], 4
      %s524 = int_to_ptr.vmem [resolvable:$true] %s523
      %526 = dma.vmem_to_hbm [thread:$0]  %s524, 128, %s3, [#allocation3]
    $region17: #{forward.1} parent=1 // pred_fallthru
      _
    // Predicated region
    $region18: #{forward.1} parent=1 // pred_check
      _
    $region19: #{forward.1} parent=1 // pred_check_branch
      %528 = sbr.rel (0) target = $region21
    $region20: #{forward.1} parent=1 // pred_region
      %529 = dma.done [#allocation3], 128
    $region21: #{forward.1} parent=1 // pred_fallthru
      _
    %530 = vsyncpa [#allocation3], 1

</llo_original>
